<compile_context>
chip_gen: v7x
topology: tpu7x:2x2x1
jax: 0.10.0
libtpu: 0.0.40
codegen_flags: <defaults>
</compile_context>

<pallas_src>
import jax
import jax.numpy as jnp
from jax.experimental import pallas as pl
from jax.experimental.pallas import tpu as pltpu

_BIG_NEG = -99999999.0


def _normalize_kernel(emb_ref, xn_ref):
    # F.normalize(p=2, dim=1), computed in f32, emitted in bf16 for the MXU.
    x = emb_ref[...].astype(jnp.float32)
    norm = jnp.maximum(jnp.sqrt(jnp.sum(x * x, axis=1, keepdims=True)), 1e-12)
    xn_ref[...] = (x / norm).astype(jnp.bfloat16)


def _make_pass1_kernel(tm):
    def kernel(xt_ref, xa_ref, tcol_ref, trow_ref, out_ref):
        i = pl.program_id(0)
        # (tm, N_pad) row block of the Gram matrix; bf16 operands, f32 accumulate.
        dist = jax.lax.dot_general(
            xt_ref[...], xa_ref[...], (((1,), (1,)), ((), ())),
            preferred_element_type=jnp.float32)
        tcol = tcol_ref[...]                       # (tm, 1)  int32
        trow = trow_ref[...]                       # (1, N_pad) int32
        same = tcol == trow
        row_g = i * tm + jax.lax.broadcasted_iota(jnp.int32, dist.shape, 0)
        col_g = jax.lax.broadcasted_iota(jnp.int32, dist.shape, 1)
        valid_col = trow >= 0                      # padded columns carry target -1
        valid_row = tcol >= 0
        is_pos = same & (row_g != col_g) & valid_col

        p_num = jnp.sum(jnp.where(is_pos, dist, 0.0), axis=1, keepdims=True)
        p_den = jnp.sum(jnp.where(is_pos, 1.0, 0.0), axis=1, keepdims=True)
        # max(den, 1) guards padded rows (and single-sample classes) against 0/0;
        # approx reciprocal runs on the otherwise-idle EUP slot.
        inv_den = pl.reciprocal(jnp.maximum(p_den, 1.0), approx=True)
        ratio = jnp.where(valid_row, p_num * inv_den, 0.0)
        # Lane-dense (1, 1, tm) partial: broadcast the tile's scalar sum.
        out_ref[...] = jnp.zeros((1, 1, tm), jnp.float32) + jnp.sum(ratio)
    return kernel


def _make_pass2_kernel(tm, s, m_max, m_min):
    def kernel(p_ref, xt_ref, xa_ref, tcol_ref, trow_ref, out_ref):
        i = pl.program_id(0)
        p_simi = p_ref[...]                        # (1, 1) f32, broadcasts below
        dist = jax.lax.dot_general(
            xt_ref[...], xa_ref[...], (((1,), (1,)), ((), ())),
            preferred_element_type=jnp.float32)    # (tm, N_pad) f32
        tcol = tcol_ref[...]
        trow = trow_ref[...]
        same = tcol == trow
        row_g = i * tm + jax.lax.broadcasted_iota(jnp.int32, dist.shape, 0)
        col_g = jax.lax.broadcasted_iota(jnp.int32, dist.shape, 1)
        valid_col = trow >= 0
        valid_row = tcol >= 0
        is_pos = same & (row_g != col_g) & valid_col
        is_neg = jnp.logical_not(same) & valid_col

        m = (m_max - m_min) * p_simi + m_min                    # (1, 1)
        hard_neg = ((p_simi - m) < dist) & is_neg
        # scale_matrix == s on every positive entry (mask_hard_neg carries a
        # (1 - mask) factor), so only the negative side needs a data-dependent
        # scale; positives use the compile-time constant s.
        scale_n = jnp.where(hard_neg, s * (p_simi + m_max - m_min), s)

        logit_p = jnp.where(is_pos, -s * dist, _BIG_NEG)
        logit_n = jnp.where(is_neg, scale_n * (dist + m), _BIG_NEG)

        def lse(z):  # stable logsumexp over dim 1, keepdims
            mx = jnp.max(z, axis=1, keepdims=True)
            return mx + jnp.log(jnp.sum(jnp.exp(z - mx), axis=1, keepdims=True))

        z = lse(logit_p) + lse(logit_n)                          # (tm, 1)
        sp = jnp.maximum(z, 0.0) + jnp.log1p(jnp.exp(-jnp.abs(z)))  # softplus
        sp = jnp.where(valid_row, sp, 0.0)                       # drop padded rows
        out_ref[...] = jnp.zeros((1, 1, tm), jnp.float32) + jnp.sum(sp)
    return kernel


def cosface_pair_loss_v2(embedding, targets, s=30.0, m_max=0.6, m_min=0.2,
                         block_rows=128):
    """embedding: (N, D) float, targets: (N,) int -> scalar f32 loss."""
    N, D = embedding.shape
    tm = block_rows            # use 64 on v7x (64 MiB VMEM/TC); 128+ on v5e/v6e
    n_pad = max(tm, ((N + tm - 1) // tm) * tm)   # multiple of tm (and of 128)
    num_tiles = n_pad // tm
    pad = n_pad - N

    # Embedding stays in its native dtype for the HBM->VMEM DMA; f32 cast is
    # done inside the normalize kernel. Pad rows with zeros, targets with -1.
    emb_p = jnp.pad(embedding, ((0, pad), (0, 0)))
    tgt_p = jnp.pad(targets.astype(jnp.int32), (0, pad), constant_values=-1)
    t_col = tgt_p.reshape(n_pad, 1)
    t_row = tgt_p.reshape(1, n_pad)

    parallel = pltpu.CompilerParams(dimension_semantics=("parallel",))

    # --- kernel 1: per-row L2 normalization -> bf16 xn ------------------------
    xn = pl.pallas_call(
        _normalize_kernel,
        out_shape=jax.ShapeDtypeStruct((n_pad, D), jnp.bfloat16),
        grid=(num_tiles,),
        in_specs=[pl.BlockSpec((tm, D), lambda i: (i, 0))],
        out_specs=pl.BlockSpec((tm, D), lambda i: (i, 0)),
        compiler_params=parallel,
    )(emb_p)

    row_tile_specs = [
        pl.BlockSpec((tm, D), lambda i: (i, 0)),       # xn row tile (matmul lhs)
        pl.BlockSpec((n_pad, D), lambda i: (0, 0)),    # xn full, VMEM-resident rhs
        pl.BlockSpec((tm, 1), lambda i: (i, 0)),       # targets column tile
        pl.BlockSpec((1, n_pad), lambda i: (0, 0)),    # targets row (full)
    ]
    part_shape = jax.ShapeDtypeStruct((num_tiles, 1, tm), jnp.float32)
    part_spec = pl.BlockSpec((1, 1, tm), lambda i: (i, 0, 0))  # lane-dense partials

    # --- kernel 2 (pass 1): per-tile sum of mean positive similarity ----------
    p_part = pl.pallas_call(
        _make_pass1_kernel(tm),
        out_shape=part_shape,
        grid=(num_tiles,),
        in_specs=row_tile_specs,
        out_specs=part_spec,
        compiler_params=parallel,
    )(xn, xn, t_col, t_row)
    p_simi = jnp.sum(p_part[:, 0, 0]) / N          # tiny cross-tile reduction

    # --- kernel 3 (pass 2): logits, masked logsumexp, softplus partials -------
    sp_part = pl.pallas_call(
        _make_pass2_kernel(tm, float(s), float(m_max), float(m_min)),
        out_shape=part_shape,
        grid=(num_tiles,),
        in_specs=[pl.BlockSpec((1, 1), lambda i: (0, 0))] + row_tile_specs,
        out_specs=part_spec,
        compiler_params=parallel,
    )(p_simi.reshape(1, 1).astype(jnp.float32), xn, xn, t_col, t_row)

    return jnp.sum(sp_part[:, 0, 0]) / N


def _reference(embedding, targets, s=30.0, m_max=0.6, m_min=0.2, bf16_matmul=True):
    # Pure-JAX mirror of the PyTorch forward. bf16_matmul=True mirrors the
    # kernel's bf16 MXU operands (f32 accumulation) for a tight comparison.
    x = embedding.astype(jnp.float32)
    xn = x / jnp.maximum(jnp.linalg.norm(x, axis=1, keepdims=True), 1e-12)
    if bf16_matmul:
        xm = xn.astype(jnp.bfloat16)
        dist = jnp.dot(xm, xm.T, preferred_element_type=jnp.float32)
    else:
        dist = jnp.dot(xn, xn.T, precision=jax.lax.Precision.HIGHEST)
    N = dist.shape[0]
    mask = (targets[:, None] == targets[None, :]).astype(jnp.float32)
    is_neg = 1.0 - mask
    is_pos = mask - jnp.eye(N, dtype=jnp.float32)
    p_simi = jnp.mean(jnp.sum(dist * is_pos, 1) / jnp.sum(is_pos, 1))
    m = (m_max - m_min) * p_simi + m_min
    mask_hard_neg = ((p_simi - m) < dist).astype(jnp.float32) * (1.0 - mask)
    scale = s * (1.0 - mask_hard_neg) + s * mask_hard_neg * (p_simi + m_max - m_min)
    logit_p = -scale * (dist * is_pos) + _BIG_NEG * (1.0 - is_pos)
    logit_n = scale * (dist * is_neg + m) + _BIG_NEG * (1.0 - is_neg)
    z = (jax.scipy.special.logsumexp(logit_p, axis=1)
         + jax.scipy.special.logsumexp(logit_n, axis=1))
    return jnp.mean(jax.nn.softplus(z))


if __name__ == "__main__":
    key = jax.random.PRNGKey(0)
    N, D = 8, 32
    embedding = jax.random.normal(key, (N, D), dtype=jnp.float32)
    # every class has >= 2 samples (PK sampling), so is_pos.sum(1) > 0 everywhere
    targets = jnp.array([0, 0, 1, 1, 2, 2, 3, 3], dtype=jnp.int32)

    loss = cosface_pair_loss_v2(embedding, targets)
    jax.block_until_ready(loss)

    ref_bf16 = _reference(embedding, targets, bf16_matmul=True)   # same MXU path
    ref_f32 = _reference(embedding, targets, bf16_matmul=False)   # full f32 path
    assert jnp.isfinite(loss), loss
    assert jnp.allclose(loss, ref_bf16, rtol=5e-3, atol=5e-3), (loss, ref_bf16)
    assert jnp.allclose(loss, ref_f32, rtol=5e-2, atol=5e-2), (loss, ref_f32)
    print("KERNEL_OK")
</pallas_src>

<mosaic_0001>
module attributes {stable_mosaic.version = 11 : i64} {
  func.func @_normalize_kernel(%arg0: i32, %arg1: memref<128x32xf32, #tpu.memory_space<vmem>>, %arg2: memref<128x32xbf16, #tpu.memory_space<vmem>>) attributes {dimension_semantics = [#tpu.dimension_semantics<parallel>], iteration_bounds = array<i64: 1>, scalar_prefetch = 0 : i64, scratch_operands = 0 : i64, tpu.core_type = #tpu.core_type<tc>, window_params = [{transform_indices = @transform_0, window_bounds = array<i64: 128, 32>}, {transform_indices = @transform_1, window_bounds = array<i64: 128, 32>}]} {
    %c0 = arith.constant 0 : index
    %c0_0 = arith.constant 0 : index
    %0 = vector.load %arg1[%c0, %c0_0] : memref<128x32xf32, #tpu.memory_space<vmem>>, vector<128x32xf32>
    %1 = arith.mulf %0, %0 : vector<128x32xf32>
    %cst = arith.constant dense<0.000000e+00> : vector<128xf32>
    %2 = vector.multi_reduction <add>, %1, %cst [1] : vector<128x32xf32> to vector<128xf32>
    %3 = vector.shape_cast %2 : vector<128xf32> to vector<128x1xf32>
    %4 = math.sqrt %3 : vector<128x1xf32>
    %cst_1 = arith.constant 9.99999996E-13 : f32
    %5 = vector.broadcast %cst_1 : f32 to vector<128x1xf32>
    %6 = arith.maximumf %4, %5 : vector<128x1xf32>
    %7 = vector.broadcast %6 : vector<128x1xf32> to vector<128x32xf32>
    %8 = arith.divf %0, %7 : vector<128x32xf32>
    %9 = arith.truncf %8 : vector<128x32xf32> to vector<128x32xbf16>
    %c0_2 = arith.constant 0 : index
    %c0_3 = arith.constant 0 : index
    %10 = vector.load %arg2[%c0_2, %c0_3] : memref<128x32xbf16, #tpu.memory_space<vmem>>, vector<128x32xbf16>
    tpu.vector_store %arg2[%c0_2, %c0_3], %9 {strides = array<i32>} : memref<128x32xbf16, #tpu.memory_space<vmem>>, vector<128x32xbf16>,
    return
  }
  func.func @transform_0(%arg0: i32) -> (i32, i32) {
    %c0_i32 = arith.constant 0 : i32
    %c0_i32_0 = arith.constant 0 : i32
    return %arg0, %c0_i32 : i32, i32
  }
  func.func @transform_1(%arg0: i32) -> (i32, i32) {
    %c0_i32 = arith.constant 0 : i32
    %c0_i32_0 = arith.constant 0 : i32
    return %arg0, %c0_i32 : i32, i32
  }
}

</mosaic_0001>

<llo_original>
// kernel: tpu_custom_call.1
$region0: #{tpu_custom_call.1}
  #allocation0 [shape = 'u32[]', space=smem, size = 0x4, offset = 0x4, fixed_abs, tag = 'smem constant byte address 0x4 - core index']
  #allocation1 [shape = 'u32[144,128]{1,0:T(1,128)}', space=vmem, size = 0x12000, scoped, tag = 'internal scratch']
  %s0 = inlined_call_operand.vmem [shape: f32[128,32], index: 0, kind: input, shape index: {}]
  %s1 = inlined_call_operand.vmem [shape: bf16[128,32], index: 1, kind: output, shape index: {}]
  %s2 = sld [smem:[#allocation0]]
  $region14: #{tpu_custom_call.1} parent=0
    _
  %s4 = ssub.s32 1, %s2
  %s5 = scalar_select 0, %s4, %s2
  // Predicated region
  $region2: #{tpu_custom_call.1} parent=0 // pred_check
    _
  $region3: #{tpu_custom_call.1} parent=0 // pred_check_branch
    %7 = sbr.rel (0) target = $region5
  $region4: #{tpu_custom_call.1} parent=0 // pred_region
    _
  $region5: #{tpu_custom_call.1} parent=0 // pred_fallthru
    _
  %v8 = vld [vmem:[%s0] sm:$0xff]
  %v9 = vld [vmem:[%s0 + $0x8] sm:$0xff]
  %v10 = vld [vmem:[%s0 + $0x10] sm:$0xff]
  %v11 = vld [vmem:[%s0 + $0x18] sm:$0xff]
  %v12 = vld [vmem:[%s0 + $0x20] sm:$0xff]
  %v13 = vld [vmem:[%s0 + $0x28] sm:$0xff]
  %v14 = vld [vmem:[%s0 + $0x30] sm:$0xff]
  %v15 = vld [vmem:[%s0 + $0x38] sm:$0xff]
  %v16 = vld [vmem:[%s0 + $0x40] sm:$0xff]
  %v17 = vld [vmem:[%s0 + $0x48] sm:$0xff]
  %v18 = vld [vmem:[%s0 + $0x50] sm:$0xff]
  %v19 = vld [vmem:[%s0 + $0x58] sm:$0xff]
  %v20 = vld [vmem:[%s0 + $0x60] sm:$0xff]
  %v21 = vld [vmem:[%s0 + $0x68] sm:$0xff]
  %v22 = vld [vmem:[%s0 + $0x70] sm:$0xff]
  %v23 = vld [vmem:[%s0 + $0x78] sm:$0xff]
  %v24 = vmul.f32 %v8, %v8
  %v25 = vmul.f32 %v9, %v9
  %v26 = vmul.f32 %v10, %v10
  %v27 = vmul.f32 %v11, %v11
  %v28 = vmul.f32 %v12, %v12
  %v29 = vmul.f32 %v13, %v13
  %v30 = vmul.f32 %v14, %v14
  %v31 = vmul.f32 %v15, %v15
  %v32 = vmul.f32 %v16, %v16
  %v33 = vmul.f32 %v17, %v17
  %v34 = vmul.f32 %v18, %v18
  %v35 = vmul.f32 %v19, %v19
  %v36 = vmul.f32 %v20, %v20
  %v37 = vmul.f32 %v21, %v21
  %v38 = vmul.f32 %v22, %v22
  %v39 = vmul.f32 %v23, %v23
  %vm40 = vcmask 261120
  %v41 = vsel %vm40, %v24, 0.0
  %42 = vadd.xlane.f32.xlu0 %v41
  %v43 = vpop.xlane.xlu0 %42
  %v44 = vsel %vm40, %v25, 0.0
  %45 = vadd.xlane.f32.xlu0 %v44
  %v46 = vpop.xlane.xlu0 %45
  %v47 = vsel %vm40, %v26, 0.0
  %48 = vadd.xlane.f32.xlu0 %v47
  %v49 = vpop.xlane.xlu0 %48
  %v50 = vsel %vm40, %v27, 0.0
  %51 = vadd.xlane.f32.xlu0 %v50
  %v52 = vpop.xlane.xlu0 %51
  %v53 = vsel %vm40, %v28, 0.0
  %54 = vadd.xlane.f32.xlu0 %v53
  %v55 = vpop.xlane.xlu0 %54
  %v56 = vsel %vm40, %v29, 0.0
  %57 = vadd.xlane.f32.xlu0 %v56
  %v58 = vpop.xlane.xlu0 %57
  %v59 = vsel %vm40, %v30, 0.0
  %60 = vadd.xlane.f32.xlu0 %v59
  %v61 = vpop.xlane.xlu0 %60
  %v62 = vsel %vm40, %v31, 0.0
  %63 = vadd.xlane.f32.xlu0 %v62
  %v64 = vpop.xlane.xlu0 %63
  %v65 = vsel %vm40, %v32, 0.0
  %66 = vadd.xlane.f32.xlu0 %v65
  %v67 = vpop.xlane.xlu0 %66
  %v68 = vsel %vm40, %v33, 0.0
  %69 = vadd.xlane.f32.xlu0 %v68
  %v70 = vpop.xlane.xlu0 %69
  %v71 = vsel %vm40, %v34, 0.0
  %72 = vadd.xlane.f32.xlu0 %v71
  %v73 = vpop.xlane.xlu0 %72
  %v74 = vsel %vm40, %v35, 0.0
  %75 = vadd.xlane.f32.xlu0 %v74
  %v76 = vpop.xlane.xlu0 %75
  %v77 = vsel %vm40, %v36, 0.0
  %78 = vadd.xlane.f32.xlu0 %v77
  %v79 = vpop.xlane.xlu0 %78
  %v80 = vsel %vm40, %v37, 0.0
  %81 = vadd.xlane.f32.xlu0 %v80
  %v82 = vpop.xlane.xlu0 %81
  %v83 = vsel %vm40, %v38, 0.0
  %84 = vadd.xlane.f32.xlu0 %v83
  %v85 = vpop.xlane.xlu0 %84
  %v86 = vsel %vm40, %v39, 0.0
  %87 = vadd.xlane.f32.xlu0 %v86
  %v88 = vpop.xlane.xlu0 %87
  %v89 = vrsqrt.pop %v43
  %v90 = vmul.f32 %v43, %v89
  %vm91 = vcmp.eq.f32.partialorder %v43, inf
  %v92 = vsel %vm91, %v43, %v90
  %vm93 = vcmp.eq.f32.partialorder %v43, 0.0
  %v94 = vand.u32 %v43, 2147483648
  %v95 = vsel %vm93, %v94, %v92
  %v96 = vrsqrt.pop %v46
  %v97 = vmul.f32 %v46, %v96
  %vm98 = vcmp.eq.f32.partialorder %v46, inf
  %v99 = vsel %vm98, %v46, %v97
  %vm100 = vcmp.eq.f32.partialorder %v46, 0.0
  %v101 = vand.u32 %v46, 2147483648
  %v102 = vsel %vm100, %v101, %v99
  %v103 = vrsqrt.pop %v49
  %v104 = vmul.f32 %v49, %v103
  %vm105 = vcmp.eq.f32.partialorder %v49, inf
  %v106 = vsel %vm105, %v49, %v104
  %vm107 = vcmp.eq.f32.partialorder %v49, 0.0
  %v108 = vand.u32 %v49, 2147483648
  %v109 = vsel %vm107, %v108, %v106
  %v110 = vrsqrt.pop %v52
  %v111 = vmul.f32 %v52, %v110
  %vm112 = vcmp.eq.f32.partialorder %v52, inf
  %v113 = vsel %vm112, %v52, %v111
  %vm114 = vcmp.eq.f32.partialorder %v52, 0.0
  %v115 = vand.u32 %v52, 2147483648
  %v116 = vsel %vm114, %v115, %v113
  %v117 = vrsqrt.pop %v55
  %v118 = vmul.f32 %v55, %v117
  %vm119 = vcmp.eq.f32.partialorder %v55, inf
  %v120 = vsel %vm119, %v55, %v118
  %vm121 = vcmp.eq.f32.partialorder %v55, 0.0
  %v122 = vand.u32 %v55, 2147483648
  %v123 = vsel %vm121, %v122, %v120
  %v124 = vrsqrt.pop %v58
  %v125 = vmul.f32 %v58, %v124
  %vm126 = vcmp.eq.f32.partialorder %v58, inf
  %v127 = vsel %vm126, %v58, %v125
  %vm128 = vcmp.eq.f32.partialorder %v58, 0.0
  %v129 = vand.u32 %v58, 2147483648
  %v130 = vsel %vm128, %v129, %v127
  %v131 = vrsqrt.pop %v61
  %v132 = vmul.f32 %v61, %v131
  %vm133 = vcmp.eq.f32.partialorder %v61, inf
  %v134 = vsel %vm133, %v61, %v132
  %vm135 = vcmp.eq.f32.partialorder %v61, 0.0
  %v136 = vand.u32 %v61, 2147483648
  %v137 = vsel %vm135, %v136, %v134
  %v138 = vrsqrt.pop %v64
  %v139 = vmul.f32 %v64, %v138
  %vm140 = vcmp.eq.f32.partialorder %v64, inf
  %v141 = vsel %vm140, %v64, %v139
  %vm142 = vcmp.eq.f32.partialorder %v64, 0.0
  %v143 = vand.u32 %v64, 2147483648
  %v144 = vsel %vm142, %v143, %v141
  %v145 = vrsqrt.pop %v67
  %v146 = vmul.f32 %v67, %v145
  %vm147 = vcmp.eq.f32.partialorder %v67, inf
  %v148 = vsel %vm147, %v67, %v146
  %vm149 = vcmp.eq.f32.partialorder %v67, 0.0
  %v150 = vand.u32 %v67, 2147483648
  %v151 = vsel %vm149, %v150, %v148
  %v152 = vrsqrt.pop %v70
  %v153 = vmul.f32 %v70, %v152
  %vm154 = vcmp.eq.f32.partialorder %v70, inf
  %v155 = vsel %vm154, %v70, %v153
  %vm156 = vcmp.eq.f32.partialorder %v70, 0.0
  %v157 = vand.u32 %v70, 2147483648
  %v158 = vsel %vm156, %v157, %v155
  %v159 = vrsqrt.pop %v73
  %v160 = vmul.f32 %v73, %v159
  %vm161 = vcmp.eq.f32.partialorder %v73, inf
  %v162 = vsel %vm161, %v73, %v160
  %vm163 = vcmp.eq.f32.partialorder %v73, 0.0
  %v164 = vand.u32 %v73, 2147483648
  %v165 = vsel %vm163, %v164, %v162
  %v166 = vrsqrt.pop %v76
  %v167 = vmul.f32 %v76, %v166
  %vm168 = vcmp.eq.f32.partialorder %v76, inf
  %v169 = vsel %vm168, %v76, %v167
  %vm170 = vcmp.eq.f32.partialorder %v76, 0.0
  %v171 = vand.u32 %v76, 2147483648
  %v172 = vsel %vm170, %v171, %v169
  %v173 = vrsqrt.pop %v79
  %v174 = vmul.f32 %v79, %v173
  %vm175 = vcmp.eq.f32.partialorder %v79, inf
  %v176 = vsel %vm175, %v79, %v174
  %vm177 = vcmp.eq.f32.partialorder %v79, 0.0
  %v178 = vand.u32 %v79, 2147483648
  %v179 = vsel %vm177, %v178, %v176
  %v180 = vrsqrt.pop %v82
  %v181 = vmul.f32 %v82, %v180
  %vm182 = vcmp.eq.f32.partialorder %v82, inf
  %v183 = vsel %vm182, %v82, %v181
  %vm184 = vcmp.eq.f32.partialorder %v82, 0.0
  %v185 = vand.u32 %v82, 2147483648
  %v186 = vsel %vm184, %v185, %v183
  %v187 = vrsqrt.pop %v85
  %v188 = vmul.f32 %v85, %v187
  %vm189 = vcmp.eq.f32.partialorder %v85, inf
  %v190 = vsel %vm189, %v85, %v188
  %vm191 = vcmp.eq.f32.partialorder %v85, 0.0
  %v192 = vand.u32 %v85, 2147483648
  %v193 = vsel %vm191, %v192, %v190
  %v194 = vrsqrt.pop %v88
  %v195 = vmul.f32 %v88, %v194
  %vm196 = vcmp.eq.f32.partialorder %v88, inf
  %v197 = vsel %vm196, %v88, %v195
  %vm198 = vcmp.eq.f32.partialorder %v88, 0.0
  %v199 = vand.u32 %v88, 2147483648
  %v200 = vsel %vm198, %v199, %v197
  %v201 = vmax.f32 %v95, 1e-12
  %v202 = vmax.f32 %v102, 1e-12
  %v203 = vmax.f32 %v109, 1e-12
  %v204 = vmax.f32 %v116, 1e-12
  %v205 = vmax.f32 %v123, 1e-12
  %v206 = vmax.f32 %v130, 1e-12
  %v207 = vmax.f32 %v137, 1e-12
  %v208 = vmax.f32 %v144, 1e-12
  %v209 = vmax.f32 %v151, 1e-12
  %v210 = vmax.f32 %v158, 1e-12
  %v211 = vmax.f32 %v165, 1e-12
  %v212 = vmax.f32 %v172, 1e-12
  %v213 = vmax.f32 %v179, 1e-12
  %v214 = vmax.f32 %v186, 1e-12
  %v215 = vmax.f32 %v193, 1e-12
  %v216 = vmax.f32 %v200, 1e-12
  %v217 = vrcp.pop %v201
  %v218 = vmul.f32 %v8, %v217
  %v219 = vrcp.pop %v202
  %v220 = vmul.f32 %v9, %v219
  %v221 = vrcp.pop %v203
  %v222 = vmul.f32 %v10, %v221
  %v223 = vrcp.pop %v204
  %v224 = vmul.f32 %v11, %v223
  %v225 = vrcp.pop %v205
  %v226 = vmul.f32 %v12, %v225
  %v227 = vrcp.pop %v206
  %v228 = vmul.f32 %v13, %v227
  %v229 = vrcp.pop %v207
  %v230 = vmul.f32 %v14, %v229
  %v231 = vrcp.pop %v208
  %v232 = vmul.f32 %v15, %v231
  %v233 = vrcp.pop %v209
  %v234 = vmul.f32 %v16, %v233
  %v235 = vrcp.pop %v210
  %v236 = vmul.f32 %v17, %v235
  %v237 = vrcp.pop %v211
  %v238 = vmul.f32 %v18, %v237
  %v239 = vrcp.pop %v212
  %v240 = vmul.f32 %v19, %v239
  %v241 = vrcp.pop %v213
  %v242 = vmul.f32 %v20, %v241
  %v243 = vrcp.pop %v214
  %v244 = vmul.f32 %v21, %v243
  %v245 = vrcp.pop %v215
  %v246 = vmul.f32 %v22, %v245
  %v247 = vrcp.pop %v216
  %v248 = vmul.f32 %v23, %v247
  %v249 = vpack.c.bf16 %v220, %v218
  %v250 = vpack.c.bf16 %v224, %v222
  %v251 = vpack.c.bf16 %v228, %v226
  %v252 = vpack.c.bf16 %v232, %v230
  %v253 = vpack.c.bf16 %v236, %v234
  %v254 = vpack.c.bf16 %v240, %v238
  %v255 = vpack.c.bf16 %v244, %v242
  %v256 = vpack.c.bf16 %v248, %v246
  %v265 = vunpack.c.l.b16 %v249
  %v266 = vunpack.c.h.b16 %v249
  %v267 = vunpack.c.l.b16 %v250
  %v268 = vunpack.c.h.b16 %v250
  %v269 = vunpack.c.l.b16 %v251
  %v270 = vunpack.c.h.b16 %v251
  %v271 = vunpack.c.l.b16 %v252
  %v272 = vunpack.c.h.b16 %v252
  %v273 = vunpack.c.l.b16 %v253
  %v274 = vunpack.c.h.b16 %v253
  %v275 = vunpack.c.l.b16 %v254
  %v276 = vunpack.c.h.b16 %v254
  %v277 = vunpack.c.l.b16 %v255
  %v278 = vunpack.c.h.b16 %v255
  %v279 = vunpack.c.l.b16 %v256
  %v280 = vunpack.c.h.b16 %v256
  %v281 = vpack.c.b16 %v265, %v265
  %v282 = vpack.c.b16 %v266, %v266
  %v283 = vpack.c.b16 %v267, %v267
  %v284 = vpack.c.b16 %v268, %v268
  %v285 = vpack.c.b16 %v269, %v269
  %v286 = vpack.c.b16 %v270, %v270
  %v287 = vpack.c.b16 %v271, %v271
  %v288 = vpack.c.b16 %v272, %v272
  %v289 = vpack.c.b16 %v273, %v273
  %v290 = vpack.c.b16 %v274, %v274
  %v291 = vpack.c.b16 %v275, %v275
  %v292 = vpack.c.b16 %v276, %v276
  %v293 = vpack.c.b16 %v277, %v277
  %v294 = vpack.c.b16 %v278, %v278
  %v295 = vpack.c.b16 %v279, %v279
  %v296 = vpack.c.b16 %v280, %v280
  %vm313 = vcmask 257024
  %314 = vst.msk [vmem:[%s1] sm:$0xf] %vm313, %v281
  %315 = vst.msk [vmem:[%s1 + $0x4] sm:$0xf] %vm313, %v282
  %316 = vst.msk [vmem:[%s1 + $0x8] sm:$0xf] %vm313, %v283
  %317 = vst.msk [vmem:[%s1 + $0xc] sm:$0xf] %vm313, %v284
  %318 = vst.msk [vmem:[%s1 + $0x10] sm:$0xf] %vm313, %v285
  %319 = vst.msk [vmem:[%s1 + $0x14] sm:$0xf] %vm313, %v286
  %320 = vst.msk [vmem:[%s1 + $0x18] sm:$0xf] %vm313, %v287
  %321 = vst.msk [vmem:[%s1 + $0x1c] sm:$0xf] %vm313, %v288
  %322 = vst.msk [vmem:[%s1 + $0x20] sm:$0xf] %vm313, %v289
  %323 = vst.msk [vmem:[%s1 + $0x24] sm:$0xf] %vm313, %v290
  %324 = vst.msk [vmem:[%s1 + $0x28] sm:$0xf] %vm313, %v291
  %325 = vst.msk [vmem:[%s1 + $0x2c] sm:$0xf] %vm313, %v292
  %326 = vst.msk [vmem:[%s1 + $0x30] sm:$0xf] %vm313, %v293
  %327 = vst.msk [vmem:[%s1 + $0x34] sm:$0xf] %vm313, %v294
  %328 = vst.msk [vmem:[%s1 + $0x38] sm:$0xf] %vm313, %v295
  %329 = vst.msk [vmem:[%s1 + $0x3c] sm:$0xf] %vm313, %v296
  // Predicated region
  $region6: #{tpu_custom_call.1} parent=0 // pred_check
    _
  $region7: #{tpu_custom_call.1} parent=0 // pred_check_branch
    %331 = sbr.rel (0) target = $region9
  $region8: #{tpu_custom_call.1} parent=0 // pred_region
    _
  $region9: #{tpu_custom_call.1} parent=0 // pred_fallthru
    _
  // Predicated region
  $region10: #{tpu_custom_call.1} parent=0 // pred_check
    _
  $region11: #{tpu_custom_call.1} parent=0 // pred_check_branch
    %333 = sbr.rel (0) target = $region13
  $region12: #{tpu_custom_call.1} parent=0 // pred_region
    _
  $region13: #{tpu_custom_call.1} parent=0 // pred_fallthru
    _

</llo_original>
